<compile_context>
chip_gen: v7x
topology: tpu7x:2x2x1
jax: 0.10.0
libtpu: 0.0.40
codegen_flags: <defaults>
</compile_context>

<pallas_src>
import functools
import math

import jax
import jax.numpy as jnp
from jax.experimental import pallas as pl
from jax.experimental.pallas import tpu as pltpu

LN_EPS = 1e-5

# Number of full-tile f32 intermediates the kernel materializes (x upcast,
# x*x / normed, gamma, pre-cast product) -- counted against the VMEM budget.
_F32_TEMPS = 4
# Grid-invariant weight blocks above this size are single-buffered.
_SINGLE_BUFFER_W_BYTES = 4 << 20


def _adaln_kernel(x_ref, cond_ref, wt_ref, o_ref):
    """One row-tile: LayerNorm over last dim + (cond @ W.T + 1) modulation.

    x_ref    : (TR, D)   activation tile (feature dim maps to lanes)
    cond_ref : (TR, Dc)  matching condition tile
    wt_ref   : (Dc, D)   transposed Linear weight; grid-invariant block
    o_ref    : (TR, D)   output tile
    """
    x = x_ref[...].astype(jnp.float32)
    inv_d = jnp.float32(1.0 / x.shape[-1])

    # --- LayerNorm (no affine): single fused pass for the statistics.
    # NOTE: E[x^2]-mean^2 is less stable than two-pass; the max(.,0) clamp plus
    # f32 accumulation is adequate for activation-scale inputs. ---
    s = jnp.sum(x, axis=-1, keepdims=True)
    s2 = jnp.sum(x * x, axis=-1, keepdims=True)
    mean = s * inv_d
    var = jnp.maximum(s2 * inv_d - mean * mean, 0.0)
    normed = (x - mean) * jax.lax.rsqrt(var + LN_EPS)

    # --- gamma = condition @ W.T on the MXU.  No operand upcast: bf16 inputs
    # stay bf16 (bf16-native MXU), accumulation is f32. ---
    gamma = jnp.dot(cond_ref[...], wt_ref[...], preferred_element_type=jnp.float32)

    o_ref[...] = (normed * (gamma + 1.0)).astype(o_ref.dtype)


def _tpu_vmem_and_cores():
    """Best-effort (physical VMEM per TensorCore, TensorCores per chip)."""
    phys = 64 << 20  # conservative default == v7x per-TC VMEM
    cores = None
    try:
        info = pltpu.get_tpu_info()
        v = getattr(info, "vmem_capacity_bytes", None)
        if isinstance(v, int) and v > 0:
            phys = v
        for name in ("num_cores", "tensor_cores", "core_count"):
            c = getattr(info, name, None)
            if isinstance(c, int) and c > 0:
                cores = c
                break
    except Exception:
        pass
    if cores is None:
        # v7x (2 TCs/chip) has 64 MiB per TC; v5e/v6e (1 TC) have 128 MiB.
        cores = 2 if phys <= (64 << 20) else 1
    return phys, cores


def _pick_row_tile(n_rows, d, dc, act_itemsize, w_itemsize):
    """Largest sublane-aligned row tile whose VMEM footprint fits the budget.

    Footprint = double-buffered x/cond/out pipelined tiles + weight buffer(s)
    + in-kernel f32 intermediates + fixed compiler-scratch slack.
    Returns (row_tile, vmem_limit_bytes, single_buffer_weight).
    """
    phys_vmem, num_tc = _tpu_vmem_and_cores()
    # Generation-aware cap: ~48 MiB on v7x (64 MiB physical per TC),
    # ~96 MiB on v5e/v6e (128 MiB physical).
    cap = min(phys_vmem - (16 << 20), (phys_vmem * 3) // 4)

    # Sublane packing: f32 -> 8 rows/vreg, bf16 -> 16, int8/fp8 -> 32.
    sub = {4: 8, 2: 16, 1: 32}.get(act_itemsize, 8)
    rows_padded = -(-n_rows // sub) * sub

    w_block = dc * d * w_itemsize
    single_buffer_w = w_block > _SINGLE_BUFFER_W_BYTES
    w_bytes = (1 if single_buffer_w else 2) * w_block

    fixed_slack = 4 << 20  # compiler-internal scratch, semaphores, etc.
    tile_budget = max(cap - w_bytes - fixed_slack, 2 << 20)

    def tile_bytes(rt):
        pipelined = 2 * rt * (2 * d + dc) * act_itemsize  # x, out, cond (2 bufs each)
        temps = _F32_TEMPS * rt * d * 4                   # in-kernel f32 intermediates
        return pipelined + temps

    best = sub
    rt = sub * 2
    while rt <= 8192:
        if rt > rows_padded:
            break
        if tile_bytes(rt) <= tile_budget:
            best = rt
        rt *= 2

    # Megacore balance: v7x has 2 TCs -> want >= 2 grid steps when row count
    # allows; single-TC chips (v5e/v6e) gain nothing from more grid steps.
    min_steps = 2 if num_tc >= 2 else 1
    while min_steps > 1 and best > 64 and -(-n_rows // best) < min_steps:
        best //= 2

    need = tile_bytes(best) + w_bytes + fixed_slack
    vmem_limit = int(min(cap, max(need + (8 << 20), 32 << 20)))
    return best, vmem_limit, single_buffer_w


@functools.partial(jax.jit, static_argnames=("row_tile",))
def adaptive_layer_norm(x, condition, w_gamma_t, *, row_tile=None):
    """AdaptiveLayerNorm forward.

    x          : (..., D)  activations, feature dim last
    condition  : (..., Dc) per-token condition, same leading dims as x
    w_gamma_t  : (Dc, D)   to_gamma.weight, pre-transposed OUTSIDE jit
    """
    D = x.shape[-1]
    Dc = condition.shape[-1]
    assert x.shape[:-1] == condition.shape[:-1]
    assert w_gamma_t.shape == (Dc, D)

    R = math.prod(x.shape[:-1])
    x2 = x.reshape(R, D)
    c2 = condition.reshape(R, Dc)

    auto_rt, vmem_limit, single_buffer_w = _pick_row_tile(
        R, D, Dc, x.dtype.itemsize, w_gamma_t.dtype.itemsize
    )
    if row_tile is None:
        row_tile = auto_rt

    grid = (pl.cdiv(R, row_tile),)

    # Grid-invariant block: DMA'd once per core, reused every step.  For large
    # production weights a single buffer is enough (frees VMEM for row tiles).
    if single_buffer_w:
        w_spec = pl.BlockSpec((Dc, D), lambda i: (0, 0), pipeline_mode=pl.Buffered(1))
    else:
        w_spec = pl.BlockSpec((Dc, D), lambda i: (0, 0))

    out2 = pl.pallas_call(
        _adaln_kernel,
        out_shape=jax.ShapeDtypeStruct((R, D), x.dtype),
        grid_spec=pltpu.PrefetchScalarGridSpec(
            num_scalar_prefetch=0,
            grid=grid,
            in_specs=[
                pl.BlockSpec((row_tile, D), lambda i: (i, 0)),
                pl.BlockSpec((row_tile, Dc), lambda i: (i, 0)),
                w_spec,
            ],
            out_specs=pl.BlockSpec((row_tile, D), lambda i: (i, 0)),
        ),
        compiler_params=pltpu.CompilerParams(
            dimension_semantics=("parallel",),
            vmem_limit_bytes=vmem_limit,
        ),
    )(x2, c2, w_gamma_t)

    return out2.reshape(x.shape)


def _reference(x, condition, w_gamma_t):
    xf = x.astype(jnp.float32)
    mean = jnp.mean(xf, axis=-1, keepdims=True)
    var = jnp.mean((xf - mean) ** 2, axis=-1, keepdims=True)
    normed = (xf - mean) / jnp.sqrt(var + LN_EPS)
    gamma = condition.astype(jnp.float32) @ w_gamma_t.astype(jnp.float32)
    return normed * (gamma + 1.0)


if __name__ == "__main__":
    key = jax.random.PRNGKey(0)
    kx, kc, kw = jax.random.split(key, 3)

    # --- small fp32 check (dim_input=128, dim_cond=32, batch=2, seq=8) ---
    B, N, D, Dc = 2, 8, 128, 32
    x = jax.random.normal(kx, (B, N, D), dtype=jnp.float32)
    cond = jax.random.normal(kc, (B, N, Dc), dtype=jnp.float32)
    # NOTE: the module zero-inits to_gamma.weight (gamma == 0 at init); use small
    # non-zero weights so the matmul path is exercised.  PyTorch layout is
    # (D, Dc) -> transpose ONCE, outside jit.
    w = 0.05 * jax.random.normal(kw, (D, Dc), dtype=jnp.float32)
    wt = jnp.asarray(w.T)  # (Dc, D)

    out = jax.block_until_ready(adaptive_layer_norm(x, cond, wt))
    ref = _reference(x, cond, wt)
    assert out.shape == (B, N, D) and out.dtype == x.dtype
    err = float(jnp.max(jnp.abs(out.astype(jnp.float32) - ref)))
    assert err < 1e-4, f"fp32 max abs err = {err}"

    # --- bf16 operands (bf16 MXU path, f32 accumulation, 16-row sublane tiles) ---
    xb = x.astype(jnp.bfloat16)
    cb = cond.astype(jnp.bfloat16)
    wtb = wt.astype(jnp.bfloat16)
    outb = jax.block_until_ready(adaptive_layer_norm(xb, cb, wtb))
    refb = _reference(xb, cb, wtb)
    assert outb.dtype == jnp.bfloat16
    errb = float(jnp.max(jnp.abs(outb.astype(jnp.float32) - refb)))
    assert errb < 5e-2, f"bf16 max abs err = {errb}"

    # --- multi-step grid with a ragged last block (exercises the tile picker;
    # R = 1500 -> row_tile 1024, grid of 2 with a partial final block) ---
    B2, N2 = 5, 300
    x2 = jax.random.normal(kx, (B2, N2, D), dtype=jnp.float32)
    c2 = jax.random.normal(kc, (B2, N2, Dc), dtype=jnp.float32)
    out2 = jax.block_until_ready(adaptive_layer_norm(x2, c2, wt))
    ref2 = _reference(x2, c2, wt)
    err2 = float(jnp.max(jnp.abs(out2.astype(jnp.float32) - ref2)))
    assert err2 < 1e-4, f"multi-tile max abs err = {err2}"

    print("KERNEL_OK")
</pallas_src>

<mosaic_0001>
module attributes {stable_mosaic.version = 11 : i64} {
  func.func @_adaln_kernel(%arg0: i32, %arg1: memref<16x128xf32, #tpu.memory_space<vmem>>, %arg2: memref<16x32xf32, #tpu.memory_space<vmem>>, %arg3: memref<32x128xf32, #tpu.memory_space<vmem>>, %arg4: memref<16x128xf32, #tpu.memory_space<vmem>>) attributes {dimension_semantics = [#tpu.dimension_semantics<parallel>], iteration_bounds = array<i64: 1>, scalar_prefetch = 0 : i64, scratch_operands = 0 : i64, tpu.core_type = #tpu.core_type<tc>, window_params = [{transform_indices = @transform_0, window_bounds = array<i64: 16, 128>}, {transform_indices = @transform_1, window_bounds = array<i64: 16, 32>}, {pipeline_mode = #tpu.pipeline_mode<synchronous>, transform_indices = @transform_2, window_bounds = array<i64: 32, 128>}, {transform_indices = @transform_3, window_bounds = array<i64: 16, 128>}]} {
    %c0 = arith.constant 0 : index
    %c0_0 = arith.constant 0 : index
    %0 = vector.load %arg1[%c0, %c0_0] : memref<16x128xf32, #tpu.memory_space<vmem>>, vector<16x128xf32>
    %cst = arith.constant dense<0.000000e+00> : vector<16xf32>
    %1 = vector.multi_reduction <add>, %0, %cst [1] : vector<16x128xf32> to vector<16xf32>
    %2 = vector.shape_cast %1 : vector<16xf32> to vector<16x1xf32>
    %3 = arith.mulf %0, %0 : vector<16x128xf32>
    %cst_1 = arith.constant dense<0.000000e+00> : vector<16xf32>
    %4 = vector.multi_reduction <add>, %3, %cst_1 [1] : vector<16x128xf32> to vector<16xf32>
    %5 = vector.shape_cast %4 : vector<16xf32> to vector<16x1xf32>
    %cst_2 = arith.constant 7.812500e-03 : f32
    %6 = vector.broadcast %cst_2 : f32 to vector<16x1xf32>
    %7 = arith.mulf %2, %6 : vector<16x1xf32>
    %cst_3 = arith.constant 7.812500e-03 : f32
    %8 = vector.broadcast %cst_3 : f32 to vector<16x1xf32>
    %9 = arith.mulf %5, %8 : vector<16x1xf32>
    %10 = arith.mulf %7, %7 : vector<16x1xf32>
    %11 = arith.subf %9, %10 : vector<16x1xf32>
    %cst_4 = arith.constant 0.000000e+00 : f32
    %12 = vector.broadcast %cst_4 : f32 to vector<16x1xf32>
    %13 = arith.maximumf %11, %12 : vector<16x1xf32>
    %14 = vector.broadcast %7 : vector<16x1xf32> to vector<16x128xf32>
    %15 = arith.subf %0, %14 : vector<16x128xf32>
    %cst_5 = arith.constant 9.99999974E-6 : f32
    %16 = vector.broadcast %cst_5 : f32 to vector<16x1xf32>
    %17 = arith.addf %13, %16 : vector<16x1xf32>
    %18 = math.rsqrt %17 : vector<16x1xf32>
    %19 = vector.broadcast %18 : vector<16x1xf32> to vector<16x128xf32>
    %20 = arith.mulf %15, %19 : vector<16x128xf32>
    %c0_6 = arith.constant 0 : index
    %c0_7 = arith.constant 0 : index
    %21 = vector.load %arg2[%c0_6, %c0_7] : memref<16x32xf32, #tpu.memory_space<vmem>>, vector<16x32xf32>
    %c0_8 = arith.constant 0 : index
    %c0_9 = arith.constant 0 : index
    %22 = vector.load %arg3[%c0_8, %c0_9] : memref<32x128xf32, #tpu.memory_space<vmem>>, vector<32x128xf32>
    %cst_10 = arith.constant dense<0.000000e+00> : vector<16x128xf32>
    %23 = tpu.matmul %21, %22, %cst_10 {dimension_numbers = #tpu.dot_dimension_numbers<[1], [0], [0], [1], [0, 0, 1, 1], [], []>} : vector<16x32xf32>, vector<32x128xf32>, vector<16x128xf32> -> vector<16x128xf32>
    %cst_11 = arith.constant 1.000000e+00 : f32
    %24 = vector.broadcast %cst_11 : f32 to vector<16x128xf32>
    %25 = arith.addf %23, %24 : vector<16x128xf32>
    %26 = arith.mulf %20, %25 : vector<16x128xf32>
    %c0_12 = arith.constant 0 : index
    %c0_13 = arith.constant 0 : index
    %27 = vector.load %arg4[%c0_12, %c0_13] : memref<16x128xf32, #tpu.memory_space<vmem>>, vector<16x128xf32>
    tpu.vector_store %arg4[%c0_12, %c0_13], %26 {strides = array<i32>} : memref<16x128xf32, #tpu.memory_space<vmem>>, vector<16x128xf32>,
    return
  }
  func.func @transform_0(%arg0: i32) -> (i32, i32) {
    %c0_i32 = arith.constant 0 : i32
    %c0_i32_0 = arith.constant 0 : i32
    return %arg0, %c0_i32 : i32, i32
  }
  func.func @transform_1(%arg0: i32) -> (i32, i32) {
    %c0_i32 = arith.constant 0 : i32
    %c0_i32_0 = arith.constant 0 : i32
    return %arg0, %c0_i32 : i32, i32
  }
  func.func @transform_2(%arg0: i32) -> (i32, i32) {
    %c0_i32 = arith.constant 0 : i32
    %c0_i32_0 = arith.constant 0 : i32
    %c0_i32_1 = arith.constant 0 : i32
    return %c0_i32, %c0_i32_0 : i32, i32
  }
  func.func @transform_3(%arg0: i32) -> (i32, i32) {
    %c0_i32 = arith.constant 0 : i32
    %c0_i32_0 = arith.constant 0 : i32
    return %arg0, %c0_i32 : i32, i32
  }
}

</mosaic_0001>

<llo_original>
// kernel: adaptive_layer_norm.1
$region0: #{adaptive_layer_norm.1}
  #allocation0 [shape = 'u32[]', space=smem, size = 0x4, offset = 0x4, fixed_abs, tag = 'smem constant byte address 0x4 - core index']
  #allocation1 [shape = 'u32[144,128]{1,0:T(1,128)}', space=vmem, size = 0x12000, scoped, tag = 'internal scratch']
  %s0 = inlined_call_operand.hbm [shape: f32[16,128], index: 0, kind: input, shape index: {}]
  %s1 = inlined_call_operand.hbm [shape: f32[16,32], index: 1, kind: input, shape index: {}]
  %s2 = inlined_call_operand.hbm [shape: f32[32,128], index: 2, kind: input, shape index: {}]
  %s3 = inlined_call_operand.hbm [shape: f32[16,128], index: 3, kind: output, shape index: {}]
  %s4 = sld [smem:[#allocation0]]
  $region34: #{adaptive_layer_norm.1} parent=0
    _
  %s6 = ssub.s32 1, %s4
  %s7 = scalar_select 0, %s6, %s4
  $region1: #{adaptive_layer_norm.1} parent=0
    #allocation2 [shape = 'u8[8192]{0}', space=vmem, size = 0x2000, scoped, tag = 'input window, operand 0, single buffered']
    #allocation3 [shape = 's32[1]{0}', space=sflag, size = 0x4, scoped, tag = 'scoped memory for adaptive_layer_norm.1']
    #allocation4 [shape = 's32[1]{0}', space=sflag, size = 0x4, scoped, tag = 'scoped memory for adaptive_layer_norm.1']
    #allocation5 [shape = 'u8[8192]{0}', space=vmem, size = 0x2000, scoped, tag = 'input window, operand 1, single buffered']
    #allocation6 [shape = 's32[1]{0}', space=sflag, size = 0x4, scoped, tag = 'scoped memory for adaptive_layer_norm.1']
    #allocation7 [shape = 'u8[16384]{0}', space=vmem, size = 0x4000, scoped, tag = 'input window, operand 2, single buffered']
    #allocation8 [shape = 'u8[8192]{0}', space=vmem, size = 0x2000, scoped, tag = 'output window, operand 0, single buffered']
    %8 = vsyncpa [#allocation3], 0
    %9 = vsyncpa [#allocation6], 0
    %10 = vsyncpa [#allocation4], 0
    // Predicated region
    $region2: #{adaptive_layer_norm.1} parent=1 // pred_check
      _
    $region3: #{adaptive_layer_norm.1} parent=1 // pred_check_branch
      %12 = sbr.rel (0) target = $region5
    $region4: #{adaptive_layer_norm.1} parent=1 // pred_region
      %s14 = ssub.s32 256, 256
      %15 = vsyncadd [#allocation3], %s14
      %s16 = sshll.u32 [#allocation2], 4
      %s17 = int_to_ptr.vmem [resolvable:$true] %s16
      %22 = dma.hbm_to_vmem [thread:$0]  %s0, 256, %s17, [#allocation3], 128, 128, 8
    $region5: #{adaptive_layer_norm.1} parent=1 // pred_fallthru
      _
    // Predicated region
    $region6: #{adaptive_layer_norm.1} parent=1 // pred_check
      _
    $region7: #{adaptive_layer_norm.1} parent=1 // pred_check_branch
      %24 = sbr.rel (0) target = $region9
    $region8: #{adaptive_layer_norm.1} parent=1 // pred_region
      %s26 = ssub.s32 256, 256
      %27 = vsyncadd [#allocation6], %s26
      %s28 = sshll.u32 [#allocation5], 4
      %s29 = int_to_ptr.vmem [resolvable:$true] %s28
      %34 = dma.hbm_to_vmem [thread:$0]  %s1, 256, %s29, [#allocation6], 128, 128, 8
    $region9: #{adaptive_layer_norm.1} parent=1 // pred_fallthru
      _
    // Predicated region
    $region10: #{adaptive_layer_norm.1} parent=1 // pred_check
      _
    $region11: #{adaptive_layer_norm.1} parent=1 // pred_check_branch
      %36 = sbr.rel (0) target = $region13
    $region12: #{adaptive_layer_norm.1} parent=1 // pred_region
      %s38 = ssub.s32 512, 512
      %39 = vsyncadd [#allocation6], %s38
      %s40 = sshll.u32 [#allocation7], 4
      %s41 = int_to_ptr.vmem [resolvable:$true] %s40
      %46 = dma.hbm_to_vmem [thread:$0]  %s2, 512, %s41, [#allocation6], 128, 128, 8
    $region13: #{adaptive_layer_norm.1} parent=1 // pred_fallthru
      _
    // Predicated region
    $region14: #{adaptive_layer_norm.1} parent=1 // pred_check
      _
    $region15: #{adaptive_layer_norm.1} parent=1 // pred_check_branch
      %48 = sbr.rel (0) target = $region17
    $region16: #{adaptive_layer_norm.1} parent=1 // pred_region
      %49 = dma.done [#allocation3], 256
    $region17: #{adaptive_layer_norm.1} parent=1 // pred_fallthru
      _
    // Predicated region
    $region18: #{adaptive_layer_norm.1} parent=1 // pred_check
      _
    $region19: #{adaptive_layer_norm.1} parent=1 // pred_check_branch
      %51 = sbr.rel (0) target = $region21
    $region20: #{adaptive_layer_norm.1} parent=1 // pred_region
      %52 = dma.done [#allocation6], 256
    $region21: #{adaptive_layer_norm.1} parent=1 // pred_fallthru
      _
    // Predicated region
    $region22: #{adaptive_layer_norm.1} parent=1 // pred_check
      _
    $region23: #{adaptive_layer_norm.1} parent=1 // pred_check_branch
      %54 = sbr.rel (0) target = $region25
    $region24: #{adaptive_layer_norm.1} parent=1 // pred_region
      %55 = dma.done [#allocation6], 512
    $region25: #{adaptive_layer_norm.1} parent=1 // pred_fallthru
      _
    %v56 = vld [vmem:[#allocation2] sm:$0xff]
    %v57 = vld [vmem:[#allocation2 + $0x8] sm:$0xff]
    %58 = vadd.xlane.f32.xlu0 %v56
    %v59 = vpop.xlane.xlu0 %58
    %60 = vadd.xlane.f32.xlu0 %v57
    %v61 = vpop.xlane.xlu0 %60
    %v62 = vmul.f32 %v56, %v56
    %v63 = vmul.f32 %v57, %v57
    %64 = vadd.xlane.f32.xlu0 %v62
    %v65 = vpop.xlane.xlu0 %64
    %66 = vadd.xlane.f32.xlu0 %v63
    %v67 = vpop.xlane.xlu0 %66
    %v68 = vmul.f32 %v59, 0.0078125
    %v69 = vmul.f32 %v61, 0.0078125
    %v70 = vmul.f32 %v65, 0.0078125
    %v71 = vmul.f32 %v67, 0.0078125
    %v72 = vmul.f32 %v68, %v68
    %v73 = vmul.f32 %v69, %v69
    %v74 = vsub.f32 %v70, %v72
    %v75 = vsub.f32 %v71, %v73
    %v76 = vmax.f32 %v74, 0.0
    %v77 = vmax.f32 %v75, 0.0
    %v78 = vsub.f32 %v56, %v68
    %v79 = vsub.f32 %v57, %v69
    %v80 = vadd.f32 %v76, 1e-05
    %v81 = vadd.f32 %v77, 1e-05
    %v82 = vrsqrt.pop %v80
    %v83 = vrsqrt.pop %v81
    %v84 = vmul.f32 %v78, %v82
    %v85 = vmul.f32 %v79, %v83
    %v86 = vld [vmem:[#allocation5] sm:$0xff]
    %v87 = vld [vmem:[#allocation5 + $0x8] sm:$0xff]
    %v88 = vld [vmem:[#allocation7] sm:$0xff]
    %v89 = vld [vmem:[#allocation7 + $0x8] sm:$0xff]
    %v90 = vld [vmem:[#allocation7 + $0x10] sm:$0xff]
    %v91 = vld [vmem:[#allocation7 + $0x18] sm:$0xff]
    %vm92 = vcmask 261120
    %v94 = vsel %vm92, %v86, 0
    %v97 = vsel %vm92, %v87, 0
    %99 = vmatprep.subr.mxu0 0.0
    %100 = vmatpush1.msra.mxu0 %v88
    %101 = vmatprep.subr.mxu0 0.0
    %102 = vmatpush1.msra.mxu0 %v89
    %103 = vmatprep.subr.mxu0 0.0
    %104 = vmatpush1.msra.mxu0 %v90
    %105 = vmatprep.subr.mxu0 0.0
    %106 = vmatpush1.msra.mxu0 %v91
    %107 = vmatprep.subr.mxu0 0.0
    %108 = vmatpush1.msra.mxu0 0.0
    %109 = vmatprep.subr.mxu0 0.0
    %110 = vmatpush1.msra.mxu0 0.0
    %111 = vmatprep.subr.mxu0 0.0
    %112 = vmatpush1.msra.mxu0 0.0
    %113 = vmatprep.subr.mxu0 0.0
    %114 = vmatpush1.msra.mxu0 0.0
    %115 = vmatprep.subr.mxu0 0.0
    %116 = vmatpush1.msra.mxu0 0.0
    %117 = vmatprep.subr.mxu0 0.0
    %118 = vmatpush1.msra.mxu0 0.0
    %119 = vmatprep.subr.mxu0 0.0
    %120 = vmatpush1.msra.mxu0 0.0
    %121 = vmatprep.subr.mxu0 0.0
    %122 = vmatpush1.msra.mxu0 0.0
    %123 = vmatprep.subr.mxu0 0.0
    %124 = vmatpush1.msra.mxu0 0.0
    %125 = vmatprep.subr.mxu0 0.0
    %126 = vmatpush1.msra.mxu0 0.0
    %127 = vmatprep.subr.mxu0 0.0
    %128 = vmatpush1.msra.mxu0 0.0
    %129 = vmatprep.subr.mxu0 0.0
    %130 = vmatpush1.msra.mxu0 0.0
    %131 = vmatprep.subr.mxu0 0.0
    %132 = vmatpush1.msra.mxu0 0.0
    %133 = vmatprep.subr.mxu0 0.0
    %134 = vmatpush1.msra.mxu0 0.0
    %135 = vmatprep.subr.mxu0 0.0
    %136 = vmatpush1.msra.mxu0 0.0
    %137 = vmatprep.subr.mxu0 0.0
    %138 = vmatpush1.msra.mxu0 0.0
    %139 = vmatprep.subr.mxu0 0.0
    %140 = vmatpush1.msra.mxu0 0.0
    %141 = vmatprep.subr.mxu0 0.0
    %142 = vmatpush1.msra.mxu0 0.0
    %143 = vmatprep.subr.mxu0 0.0
    %144 = vmatpush1.msra.mxu0 0.0
    %145 = vmatprep.subr.mxu0 0.0
    %146 = vmatpush1.msra.mxu0 0.0
    %147 = vmatprep.subr.mxu0 0.0
    %148 = vmatpush1.msra.mxu0 0.0
    %149 = vmatprep.subr.mxu0 0.0
    %150 = vmatpush1.msra.mxu0 0.0
    %151 = vmatprep.subr.mxu0 0.0
    %152 = vmatpush1.msra.mxu0 0.0
    %153 = vmatprep.subr.mxu0 0.0
    %154 = vmatpush1.msra.mxu0 0.0
    %155 = vmatprep.subr.mxu0 0.0
    %156 = vmatpush1.msra.mxu0 0.0
    %157 = vmatprep.subr.mxu0 0.0
    %158 = vmatpush1.msra.mxu0 0.0
    %159 = vmatprep.subr.mxu0 0.0
    %160 = vmatpush1.msra.mxu0 0.0
    %161 = vmatprep.subr.mxu0 0.0
    %162 = vmatpush1.msra.mxu0 0.0
    %163 = vmatprep.mubr.f32.mxu0 0.0
    %164 = vmatmul.mubr.f32.gmra.mrb[0].mxu0 %v94
    %v165 = vpop.f32.mrb[0].mxu0
    %v166 = vadd.f32 1.0, %v165
    %v167 = vpop.f32.mrb[0].mxu0
    %168 = vmatprep.mubr.f32.mxu0 0.0
    %169 = vmatmul.mubr.f32.gmra.mrb[0].mxu0 %v97
    %v170 = vpop.f32.mrb[0].mxu0
    %v171 = vadd.f32 1.0, %v170
    %v172 = vpop.f32.mrb[0].mxu0
    %173 = vdwg.mxu0
    %v174 = vmul.f32 %v84, %v166
    %v175 = vmul.f32 %v85, %v171
    %176 = vst [vmem:[#allocation8] sm:$0xff] %v174
    %177 = vst [vmem:[#allocation8 + $0x8] sm:$0xff] %v175
    // Predicated region
    $region26: #{adaptive_layer_norm.1} parent=1 // pred_check
      _
    $region27: #{adaptive_layer_norm.1} parent=1 // pred_check_branch
      %179 = sbr.rel (0) target = $region29
    $region28: #{adaptive_layer_norm.1} parent=1 // pred_region
      %s181 = ssub.s32 256, 256
      %182 = vsyncadd [#allocation4], %s181
      %s183 = sshll.u32 [#allocation8], 4
      %s184 = int_to_ptr.vmem [resolvable:$true] %s183
      %189 = dma.vmem_to_hbm [thread:$0]  %s184, 256, %s3, [#allocation4], 128, 128, 8
    $region29: #{adaptive_layer_norm.1} parent=1 // pred_fallthru
      _
    // Predicated region
    $region30: #{adaptive_layer_norm.1} parent=1 // pred_check
      _
    $region31: #{adaptive_layer_norm.1} parent=1 // pred_check_branch
      %191 = sbr.rel (0) target = $region33
    $region32: #{adaptive_layer_norm.1} parent=1 // pred_region
      %192 = dma.done [#allocation4], 256
    $region33: #{adaptive_layer_norm.1} parent=1 // pred_fallthru
      _
    %193 = vsyncpa [#allocation3], 1
    %194 = vsyncpa [#allocation6], 1
    %195 = vsyncpa [#allocation4], 1

</llo_original>
